<compile_context>
chip_gen: v7x
topology: tpu7x:2x2x1
jax: 0.10.0
libtpu: 0.0.40
codegen_flags: <defaults>
</compile_context>

<pallas_src>
import functools

import jax
import jax.numpy as jnp
from jax import lax
from jax.experimental import pallas as pl
from jax.experimental.pallas import tpu as pltpu


def _triplet_kernel(q_ref, p_ref, n_ref, losses_ref, *, margin, distance):
    """Per-block triplet losses.

    Block shapes: (TB, D) inputs (D is the full feature extent, so no lane
    masking is needed even when D is not a multiple of 128), (TB, 1) output.
    Ragged last batch block: garbage rows stay per-row and are masked on
    writeback by Pallas.
    """
    q = q_ref[...].astype(jnp.float32)
    p = p_ref[...].astype(jnp.float32)
    m = jnp.float32(margin)

    if distance == "l2-norm":
        # F.pairwise_distance: eps=1e-6 is added to the difference before the norm.
        eps = jnp.float32(1e-6)
        diff_p = q - p + eps
        dp = jnp.sqrt(jnp.sum(diff_p * diff_p, axis=-1, keepdims=True))
        # Load `negative` only after d_pos is fully reduced (lower vreg pressure).
        n = n_ref[...].astype(jnp.float32)
        diff_n = q - n + eps
        dn = jnp.sqrt(jnp.sum(diff_n * diff_n, axis=-1, keepdims=True))
        losses = jnp.maximum(dp - dn + m, 0.0)

    elif distance == "cosine":
        # F.cosine_similarity clamps each norm to eps=1e-8 separately:
        #   1 / max(||x||, eps) == min(rsqrt(||x||^2), 1/eps)
        inv_eps = jnp.float32(1e8)
        inv_qn = jnp.minimum(lax.rsqrt(jnp.sum(q * q, axis=-1, keepdims=True)), inv_eps)
        inv_pn = jnp.minimum(lax.rsqrt(jnp.sum(p * p, axis=-1, keepdims=True)), inv_eps)
        sim_p = jnp.sum(q * p, axis=-1, keepdims=True) * inv_qn * inv_pn
        n = n_ref[...].astype(jnp.float32)
        inv_nn = jnp.minimum(lax.rsqrt(jnp.sum(n * n, axis=-1, keepdims=True)), inv_eps)
        sim_n = jnp.sum(q * n, axis=-1, keepdims=True) * inv_qn * inv_nn
        losses = jnp.maximum(-sim_p + sim_n + m, 0.0)

    elif distance == "dot":
        dp = jnp.sum(q * p, axis=-1, keepdims=True)
        n = n_ref[...].astype(jnp.float32)
        dn = jnp.sum(q * n, axis=-1, keepdims=True)
        losses = jnp.maximum(-dp + dn + m, 0.0)

    else:
        raise TypeError(f"Unrecognized option for `distance`:{distance}")

    losses_ref[...] = losses  # (TB, 1)


def _pick_block_b(b, d, in_itemsize, block_b=None):
    """Pick the batch tile.

    Tiles are multiples of 128 rows (valid sublane tiling for f32/bf16/int8)
    or exactly the whole batch (block dims == array dims is always legal).
    The VMEM budget accounts for 3 inputs x 2 pipeline buffers (input dtype)
    plus ~4 live (TB, D) f32 temporaries inside the kernel.
    """
    if block_b is not None:
        tb = max(128, (int(block_b) // 128) * 128)
        return b if tb >= b else tb

    bytes_per_row = (3 * 2 * in_itemsize + 4 * 4) * max(d, 1)
    budget = 20 * 1024 * 1024
    tb = min(2048, max(128, (budget // bytes_per_row) // 128 * 128))
    if tb >= b:
        # Whole batch fits in one block.  If it is big enough, split in two so
        # the "parallel" grid axis can shard across v7x's two TensorCores
        # (per-step overhead stays negligible at these sizes).
        if b >= 512 and 3 * b * d * in_itemsize >= (4 << 20):
            return max(128, (b // 2) // 128 * 128)
        return b
    return tb


def _ref_losses(query, positive, negative, margin, distance):
    """Pure-JAX per-example losses matching the PyTorch forward."""
    q = query.astype(jnp.float32)
    p = positive.astype(jnp.float32)
    n = negative.astype(jnp.float32)
    if distance == "l2-norm":
        eps = 1e-6
        dp = jnp.sqrt(jnp.sum((q - p + eps) ** 2, axis=-1))
        dn = jnp.sqrt(jnp.sum((q - n + eps) ** 2, axis=-1))
        return jnp.maximum(dp - dn + margin, 0.0)
    if distance == "cosine":
        eps = 1e-8
        qn = jnp.maximum(jnp.linalg.norm(q, axis=-1), eps)
        pn = jnp.maximum(jnp.linalg.norm(p, axis=-1), eps)
        nn_ = jnp.maximum(jnp.linalg.norm(n, axis=-1), eps)
        sp = jnp.sum(q * p, axis=-1) / (qn * pn)
        sn = jnp.sum(q * n, axis=-1) / (qn * nn_)
        return jnp.maximum(-sp + sn + margin, 0.0)
    if distance == "dot":
        dp = jnp.sum(q * p, axis=-1)
        dn = jnp.sum(q * n, axis=-1)
        return jnp.maximum(-dp + dn + margin, 0.0)
    raise TypeError(f"Unrecognized option for `distance`:{distance}")


def triplet_loss(query, positive, negative, *, margin=1.0, distance="l2-norm",
                 reduction="mean", block_b=None, pallas_min_bytes=384 * 1024):
    assert query.shape == positive.shape == negative.shape
    assert query.ndim == 2
    b, d = query.shape
    in_itemsize = query.dtype.itemsize
    total_in_bytes = 3 * b * d * in_itemsize

    if total_in_bytes < pallas_min_bytes:
        # Fixed pallas_call/grid setup overhead dominates tiny problems; a
        # fused XLA elementwise graph is strictly faster there.
        losses = _ref_losses(query, positive, negative, margin, distance)
    else:
        tb = _pick_block_b(b, d, in_itemsize, block_b)
        grid = pl.cdiv(b, tb)
        kernel = functools.partial(_triplet_kernel, margin=margin, distance=distance)

        # VMEM actually needed: double-buffered input tiles + live f32 temps.
        needed = 3 * 2 * tb * d * in_itemsize + 4 * tb * d * 4 + 4 * tb
        vmem_limit = int(max(32 << 20, min(48 << 20, 2 * needed)))

        losses_col = pl.pallas_call(
            kernel,
            out_shape=jax.ShapeDtypeStruct((b, 1), jnp.float32),
            grid_spec=pltpu.PrefetchScalarGridSpec(
                num_scalar_prefetch=0,
                grid=(grid,),
                in_specs=[
                    pl.BlockSpec((tb, d), lambda i: (i, 0)),
                    pl.BlockSpec((tb, d), lambda i: (i, 0)),
                    pl.BlockSpec((tb, d), lambda i: (i, 0)),
                ],
                out_specs=pl.BlockSpec((tb, 1), lambda i: (i, 0)),
            ),
            compiler_params=pltpu.CompilerParams(
                dimension_semantics=("parallel",),
                vmem_limit_bytes=vmem_limit,
            ),
        )(query, positive, negative)
        losses = losses_col[:, 0]

    if reduction == "mean":
        return jnp.mean(losses)
    elif reduction == "sum":
        return jnp.sum(losses)
    elif reduction == "none":
        return losses
    else:
        raise TypeError(f"Unrecognized option for `reduction`:{reduction}")


if __name__ == "__main__":
    key = jax.random.PRNGKey(0)
    kq, kp, kn = jax.random.split(key, 3)

    ok = True

    # 1) SPECTER-like embeddings (D=768): large enough to take the Pallas path.
    B, D = 64, 768
    q = jax.random.normal(kq, (B, D), dtype=jnp.float32)
    p = jax.random.normal(kp, (B, D), dtype=jnp.float32)
    n = jax.random.normal(kn, (B, D), dtype=jnp.float32)
    loss = triplet_loss(q, p, n, margin=1.0, distance="l2-norm", reduction="mean")
    jax.block_until_ready(loss)
    ref = jnp.mean(_ref_losses(q, p, n, 1.0, "l2-norm"))
    ok &= bool(jnp.allclose(loss, ref, atol=1e-5, rtol=1e-5))

    # 2) Misaligned D and B with an explicit 128-row tile -> ragged last grid step.
    B2, D2 = 300, 130
    q2 = jax.random.normal(kq, (B2, D2), dtype=jnp.float32)
    p2 = jax.random.normal(kp, (B2, D2), dtype=jnp.float32)
    n2 = jax.random.normal(kn, (B2, D2), dtype=jnp.float32)
    loss2 = triplet_loss(q2, p2, n2, margin=1.0, distance="l2-norm",
                         reduction="mean", block_b=128)
    jax.block_until_ready(loss2)
    ref2 = jnp.mean(_ref_losses(q2, p2, n2, 1.0, "l2-norm"))
    ok &= bool(jnp.allclose(loss2, ref2, atol=1e-5, rtol=1e-5))

    # 3) Cosine / sum through the kernel (force the Pallas path).
    B3, D3 = 16, 256
    q3 = jax.random.normal(kq, (B3, D3), dtype=jnp.float32)
    p3 = jax.random.normal(kp, (B3, D3), dtype=jnp.float32)
    n3 = jax.random.normal(kn, (B3, D3), dtype=jnp.float32)
    loss3 = triplet_loss(q3, p3, n3, margin=1.0, distance="cosine",
                         reduction="sum", pallas_min_bytes=0)
    jax.block_until_ready(loss3)
    ref3 = jnp.sum(_ref_losses(q3, p3, n3, 1.0, "cosine"))
    ok &= bool(jnp.allclose(loss3, ref3, atol=1e-4, rtol=1e-4))

    # 4) Dot / none through the kernel (force the Pallas path).
    loss4 = triplet_loss(q3, p3, n3, margin=1.0, distance="dot",
                         reduction="none", pallas_min_bytes=0)
    jax.block_until_ready(loss4)
    ref4 = _ref_losses(q3, p3, n3, 1.0, "dot")
    ok &= bool(jnp.allclose(loss4, ref4, atol=1e-4, rtol=1e-4))

    # 5) Odd full-block shapes through the kernel (block dims == array dims).
    B5, D5 = 10, 50
    q5 = jax.random.normal(kq, (B5, D5), dtype=jnp.float32)
    p5 = jax.random.normal(kp, (B5, D5), dtype=jnp.float32)
    n5 = jax.random.normal(kn, (B5, D5), dtype=jnp.float32)
    loss5 = triplet_loss(q5, p5, n5, margin=1.0, distance="l2-norm",
                         reduction="mean", pallas_min_bytes=0)
    jax.block_until_ready(loss5)
    ref5 = jnp.mean(_ref_losses(q5, p5, n5, 1.0, "l2-norm"))
    ok &= bool(jnp.allclose(loss5, ref5, atol=1e-5, rtol=1e-5))

    # 6) Tiny problem takes the fused-XLA fast path (dispatch sanity check).
    B6, D6 = 8, 32
    q6 = jax.random.normal(kq, (B6, D6), dtype=jnp.float32)
    p6 = jax.random.normal(kp, (B6, D6), dtype=jnp.float32)
    n6 = jax.random.normal(kn, (B6, D6), dtype=jnp.float32)
    loss6 = triplet_loss(q6, p6, n6, margin=1.0, distance="l2-norm",
                         reduction="mean")
    jax.block_until_ready(loss6)
    ref6 = jnp.mean(_ref_losses(q6, p6, n6, 1.0, "l2-norm"))
    ok &= bool(jnp.allclose(loss6, ref6, atol=1e-6, rtol=1e-6))

    assert ok, "mismatch vs pure-JAX reference"
    print("KERNEL_OK")
</pallas_src>

<mosaic_0001>
module attributes {stable_mosaic.version = 11 : i64} {
  func.func @_triplet_kernel(%arg0: i32, %arg1: memref<64x768xf32, #tpu.memory_space<vmem>>, %arg2: memref<64x768xf32, #tpu.memory_space<vmem>>, %arg3: memref<64x768xf32, #tpu.memory_space<vmem>>, %arg4: memref<64x1xf32, #tpu.memory_space<vmem>>) attributes {dimension_semantics = [#tpu.dimension_semantics<parallel>], iteration_bounds = array<i64: 1>, scalar_prefetch = 0 : i64, scratch_operands = 0 : i64, tpu.core_type = #tpu.core_type<tc>, window_params = [{transform_indices = @transform_0, window_bounds = array<i64: 64, 768>}, {transform_indices = @transform_1, window_bounds = array<i64: 64, 768>}, {transform_indices = @transform_2, window_bounds = array<i64: 64, 768>}, {transform_indices = @transform_3, window_bounds = array<i64: 64, 1>}]} {
    %c0 = arith.constant 0 : index
    %c0_0 = arith.constant 0 : index
    %0 = vector.load %arg1[%c0, %c0_0] : memref<64x768xf32, #tpu.memory_space<vmem>>, vector<64x768xf32>
    %c0_1 = arith.constant 0 : index
    %c0_2 = arith.constant 0 : index
    %1 = vector.load %arg2[%c0_1, %c0_2] : memref<64x768xf32, #tpu.memory_space<vmem>>, vector<64x768xf32>
    %2 = arith.subf %0, %1 : vector<64x768xf32>
    %cst = arith.constant 9.99999997E-7 : f32
    %3 = vector.broadcast %cst : f32 to vector<64x768xf32>
    %4 = arith.addf %2, %3 : vector<64x768xf32>
    %5 = arith.mulf %4, %4 : vector<64x768xf32>
    %cst_3 = arith.constant dense<0.000000e+00> : vector<64xf32>
    %6 = vector.multi_reduction <add>, %5, %cst_3 [1] : vector<64x768xf32> to vector<64xf32>
    %7 = vector.shape_cast %6 : vector<64xf32> to vector<64x1xf32>
    %8 = math.sqrt %7 : vector<64x1xf32>
    %c0_4 = arith.constant 0 : index
    %c0_5 = arith.constant 0 : index
    %9 = vector.load %arg3[%c0_4, %c0_5] : memref<64x768xf32, #tpu.memory_space<vmem>>, vector<64x768xf32>
    %10 = arith.subf %0, %9 : vector<64x768xf32>
    %cst_6 = arith.constant 9.99999997E-7 : f32
    %11 = vector.broadcast %cst_6 : f32 to vector<64x768xf32>
    %12 = arith.addf %10, %11 : vector<64x768xf32>
    %13 = arith.mulf %12, %12 : vector<64x768xf32>
    %cst_7 = arith.constant dense<0.000000e+00> : vector<64xf32>
    %14 = vector.multi_reduction <add>, %13, %cst_7 [1] : vector<64x768xf32> to vector<64xf32>
    %15 = vector.shape_cast %14 : vector<64xf32> to vector<64x1xf32>
    %16 = math.sqrt %15 : vector<64x1xf32>
    %17 = arith.subf %8, %16 : vector<64x1xf32>
    %cst_8 = arith.constant 1.000000e+00 : f32
    %18 = vector.broadcast %cst_8 : f32 to vector<64x1xf32>
    %19 = arith.addf %17, %18 : vector<64x1xf32>
    %cst_9 = arith.constant 0.000000e+00 : f32
    %20 = vector.broadcast %cst_9 : f32 to vector<64x1xf32>
    %21 = arith.maximumf %19, %20 : vector<64x1xf32>
    %c0_10 = arith.constant 0 : index
    %c0_11 = arith.constant 0 : index
    %22 = vector.load %arg4[%c0_10, %c0_11] : memref<64x1xf32, #tpu.memory_space<vmem>>, vector<64x1xf32>
    tpu.vector_store %arg4[%c0_10, %c0_11], %21 {strides = array<i32>} : memref<64x1xf32, #tpu.memory_space<vmem>>, vector<64x1xf32>,
    return
  }
  func.func @transform_0(%arg0: i32) -> (i32, i32) {
    %c0_i32 = arith.constant 0 : i32
    %c0_i32_0 = arith.constant 0 : i32
    return %arg0, %c0_i32 : i32, i32
  }
  func.func @transform_1(%arg0: i32) -> (i32, i32) {
    %c0_i32 = arith.constant 0 : i32
    %c0_i32_0 = arith.constant 0 : i32
    return %arg0, %c0_i32 : i32, i32
  }
  func.func @transform_2(%arg0: i32) -> (i32, i32) {
    %c0_i32 = arith.constant 0 : i32
    %c0_i32_0 = arith.constant 0 : i32
    return %arg0, %c0_i32 : i32, i32
  }
  func.func @transform_3(%arg0: i32) -> (i32, i32) {
    %c0_i32 = arith.constant 0 : i32
    %c0_i32_0 = arith.constant 0 : i32
    return %arg0, %c0_i32 : i32, i32
  }
}

</mosaic_0001>

<llo_original>
// kernel: tpu_custom_call.1
$region0: #{tpu_custom_call.1}
  #allocation0 [shape = 'u32[]', space=smem, size = 0x4, offset = 0x4, fixed_abs, tag = 'smem constant byte address 0x4 - core index']
  #allocation1 [shape = 'u32[144,128]{1,0:T(1,128)}', space=vmem, size = 0x12000, scoped, tag = 'internal scratch']
  %s0 = inlined_call_operand.hbm [shape: f32[64,768], index: 0, kind: input, shape index: {}]
  %s1 = inlined_call_operand.hbm [shape: f32[64,768], index: 1, kind: input, shape index: {}]
  %s2 = inlined_call_operand.hbm [shape: f32[64,768], index: 2, kind: input, shape index: {}]
  %s3 = inlined_call_operand.vmem [shape: f32[64,1], index: 3, kind: output, shape index: {}]
  %s4 = sld [smem:[#allocation0]]
  $region34: #{tpu_custom_call.1} parent=0
    _
  %s6 = ssub.s32 1, %s4
  %s7 = scalar_select 0, %s6, %s4
  $region1: #{tpu_custom_call.1} parent=0
    #allocation2 [shape = 'u8[196608]{0}', space=vmem, size = 0x30000, scoped, tag = 'input window, operand 0, single buffered']
    #allocation3 [shape = 's32[1]{0}', space=sflag, size = 0x4, scoped, tag = 'scoped memory for tpu_custom_call.1']
    #allocation4 [shape = 'u8[196608]{0}', space=vmem, size = 0x30000, scoped, tag = 'input window, operand 1, single buffered']
    #allocation5 [shape = 's32[1]{0}', space=sflag, size = 0x4, scoped, tag = 'scoped memory for tpu_custom_call.1']
    #allocation6 [shape = 'u8[196608]{0}', space=vmem, size = 0x30000, scoped, tag = 'input window, operand 2, single buffered']
    %8 = vsyncpa [#allocation3], 0
    %9 = vsyncpa [#allocation5], 0
    // Predicated region
    $region2: #{tpu_custom_call.1} parent=1 // pred_check
      _
    $region3: #{tpu_custom_call.1} parent=1 // pred_check_branch
      %11 = sbr.rel (0) target = $region5
    $region4: #{tpu_custom_call.1} parent=1 // pred_region
      %s13 = ssub.s32 6144, 6144
      %14 = vsyncadd [#allocation3], %s13
      %s15 = sshll.u32 [#allocation2], 4
      %s16 = int_to_ptr.vmem [resolvable:$true] %s15
      %21 = dma.hbm_to_vmem [thread:$0]  %s0, 6144, %s16, [#allocation3], 768, 768, 48
    $region5: #{tpu_custom_call.1} parent=1 // pred_fallthru
      _
    // Predicated region
    $region6: #{tpu_custom_call.1} parent=1 // pred_check
      _
    $region7: #{tpu_custom_call.1} parent=1 // pred_check_branch
      %23 = sbr.rel (0) target = $region9
    $region8: #{tpu_custom_call.1} parent=1 // pred_region
      %s25 = ssub.s32 6144, 6144
      %26 = vsyncadd [#allocation5], %s25
      %s27 = sshll.u32 [#allocation4], 4
      %s28 = int_to_ptr.vmem [resolvable:$true] %s27
      %33 = dma.hbm_to_vmem [thread:$0]  %s1, 6144, %s28, [#allocation5], 768, 768, 48
    $region9: #{tpu_custom_call.1} parent=1 // pred_fallthru
      _
    // Predicated region
    $region10: #{tpu_custom_call.1} parent=1 // pred_check
      _
    $region11: #{tpu_custom_call.1} parent=1 // pred_check_branch
      %35 = sbr.rel (0) target = $region13
    $region12: #{tpu_custom_call.1} parent=1 // pred_region
      %s37 = ssub.s32 6144, 6144
      %38 = vsyncadd [#allocation5], %s37
      %s39 = sshll.u32 [#allocation6], 4
      %s40 = int_to_ptr.vmem [resolvable:$true] %s39
      %45 = dma.hbm_to_vmem [thread:$0]  %s2, 6144, %s40, [#allocation5], 768, 768, 48
    $region13: #{tpu_custom_call.1} parent=1 // pred_fallthru
      _
    // Predicated region
    $region14: #{tpu_custom_call.1} parent=1 // pred_check
      _
    $region15: #{tpu_custom_call.1} parent=1 // pred_check_branch
      %47 = sbr.rel (0) target = $region17
    $region16: #{tpu_custom_call.1} parent=1 // pred_region
      %48 = dma.done [#allocation3], 6144
    $region17: #{tpu_custom_call.1} parent=1 // pred_fallthru
      _
    // Predicated region
    $region18: #{tpu_custom_call.1} parent=1 // pred_check
      _
    $region19: #{tpu_custom_call.1} parent=1 // pred_check_branch
      %50 = sbr.rel (0) target = $region21
    $region20: #{tpu_custom_call.1} parent=1 // pred_region
      %51 = dma.done [#allocation5], 6144
    $region21: #{tpu_custom_call.1} parent=1 // pred_fallthru
      _
    // Predicated region
    $region22: #{tpu_custom_call.1} parent=1 // pred_check
      _
    $region23: #{tpu_custom_call.1} parent=1 // pred_check_branch
      %53 = sbr.rel (0) target = $region25
    $region24: #{tpu_custom_call.1} parent=1 // pred_region
      %54 = dma.done [#allocation5], 6144
    $region25: #{tpu_custom_call.1} parent=1 // pred_fallthru
      _
    %v55 = vld [vmem:[#allocation2] sm:$0xff]
    %v56 = vld [vmem:[#allocation2 + $0x8] sm:$0xff]
    %v57 = vld [vmem:[#allocation2 + $0x10] sm:$0xff]
    %v58 = vld [vmem:[#allocation2 + $0x18] sm:$0xff]
    %v59 = vld [vmem:[#allocation2 + $0x20] sm:$0xff]
    %v60 = vld [vmem:[#allocation2 + $0x28] sm:$0xff]
    %v61 = vld [vmem:[#allocation2 + $0x30] sm:$0xff]
    %v62 = vld [vmem:[#allocation2 + $0x38] sm:$0xff]
    %v63 = vld [vmem:[#allocation2 + $0x40] sm:$0xff]
    %v64 = vld [vmem:[#allocation2 + $0x48] sm:$0xff]
    %v65 = vld [vmem:[#allocation2 + $0x50] sm:$0xff]
    %v66 = vld [vmem:[#allocation2 + $0x58] sm:$0xff]
    %v67 = vld [vmem:[#allocation2 + $0x60] sm:$0xff]
    %v68 = vld [vmem:[#allocation2 + $0x68] sm:$0xff]
    %v69 = vld [vmem:[#allocation2 + $0x70] sm:$0xff]
    %v70 = vld [vmem:[#allocation2 + $0x78] sm:$0xff]
    %v71 = vld [vmem:[#allocation2 + $0x80] sm:$0xff]
    %v72 = vld [vmem:[#allocation2 + $0x88] sm:$0xff]
    %v73 = vld [vmem:[#allocation2 + $0x90] sm:$0xff]
    %v74 = vld [vmem:[#allocation2 + $0x98] sm:$0xff]
    %v75 = vld [vmem:[#allocation2 + $0xa0] sm:$0xff]
    %v76 = vld [vmem:[#allocation2 + $0xa8] sm:$0xff]
    %v77 = vld [vmem:[#allocation2 + $0xb0] sm:$0xff]
    %v78 = vld [vmem:[#allocation2 + $0xb8] sm:$0xff]
    %v79 = vld [vmem:[#allocation2 + $0xc0] sm:$0xff]
    %v80 = vld [vmem:[#allocation2 + $0xc8] sm:$0xff]
    %v81 = vld [vmem:[#allocation2 + $0xd0] sm:$0xff]
    %v82 = vld [vmem:[#allocation2 + $0xd8] sm:$0xff]
    %v83 = vld [vmem:[#allocation2 + $0xe0] sm:$0xff]
    %v84 = vld [vmem:[#allocation2 + $0xe8] sm:$0xff]
    %v85 = vld [vmem:[#allocation2 + $0xf0] sm:$0xff]
    %v86 = vld [vmem:[#allocation2 + $0xf8] sm:$0xff]
    %v87 = vld [vmem:[#allocation2 + $0x100] sm:$0xff]
    %v88 = vld [vmem:[#allocation2 + $0x108] sm:$0xff]
    %v89 = vld [vmem:[#allocation2 + $0x110] sm:$0xff]
    %v90 = vld [vmem:[#allocation2 + $0x118] sm:$0xff]
    %v91 = vld [vmem:[#allocation2 + $0x120] sm:$0xff]
    %v92 = vld [vmem:[#allocation2 + $0x128] sm:$0xff]
    %v93 = vld [vmem:[#allocation2 + $0x130] sm:$0xff]
    %v94 = vld [vmem:[#allocation2 + $0x138] sm:$0xff]
    %v95 = vld [vmem:[#allocation2 + $0x140] sm:$0xff]
    %v96 = vld [vmem:[#allocation2 + $0x148] sm:$0xff]
    %v97 = vld [vmem:[#allocation2 + $0x150] sm:$0xff]
    %v98 = vld [vmem:[#allocation2 + $0x158] sm:$0xff]
    %v99 = vld [vmem:[#allocation2 + $0x160] sm:$0xff]
    %v100 = vld [vmem:[#allocation2 + $0x168] sm:$0xff]
    %v101 = vld [vmem:[#allocation2 + $0x170] sm:$0xff]
    %v102 = vld [vmem:[#allocation2 + $0x178] sm:$0xff]
    %v103 = vld [vmem:[#allocation4] sm:$0xff]
    %v104 = vld [vmem:[#allocation4 + $0x8] sm:$0xff]
    %v105 = vld [vmem:[#allocation4 + $0x10] sm:$0xff]
    %v106 = vld [vmem:[#allocation4 + $0x18] sm:$0xff]
    %v107 = vld [vmem:[#allocation4 + $0x20] sm:$0xff]
    %v108 = vld [vmem:[#allocation4 + $0x28] sm:$0xff]
    %v109 = vld [vmem:[#allocation4 + $0x30] sm:$0xff]
    %v110 = vld [vmem:[#allocation4 + $0x38] sm:$0xff]
    %v111 = vld [vmem:[#allocation4 + $0x40] sm:$0xff]
    %v112 = vld [vmem:[#allocation4 + $0x48] sm:$0xff]
    %v113 = vld [vmem:[#allocation4 + $0x50] sm:$0xff]
    %v114 = vld [vmem:[#allocation4 + $0x58] sm:$0xff]
    %v115 = vld [vmem:[#allocation4 + $0x60] sm:$0xff]
    %v116 = vld [vmem:[#allocation4 + $0x68] sm:$0xff]
    %v117 = vld [vmem:[#allocation4 + $0x70] sm:$0xff]
    %v118 = vld [vmem:[#allocation4 + $0x78] sm:$0xff]
    %v119 = vld [vmem:[#allocation4 + $0x80] sm:$0xff]
    %v120 = vld [vmem:[#allocation4 + $0x88] sm:$0xff]
    %v121 = vld [vmem:[#allocation4 + $0x90] sm:$0xff]
    %v122 = vld [vmem:[#allocation4 + $0x98] sm:$0xff]
    %v123 = vld [vmem:[#allocation4 + $0xa0] sm:$0xff]
    %v124 = vld [vmem:[#allocation4 + $0xa8] sm:$0xff]
    %v125 = vld [vmem:[#allocation4 + $0xb0] sm:$0xff]
    %v126 = vld [vmem:[#allocation4 + $0xb8] sm:$0xff]
    %v127 = vld [vmem:[#allocation4 + $0xc0] sm:$0xff]
    %v128 = vld [vmem:[#allocation4 + $0xc8] sm:$0xff]
    %v129 = vld [vmem:[#allocation4 + $0xd0] sm:$0xff]
    %v130 = vld [vmem:[#allocation4 + $0xd8] sm:$0xff]
    %v131 = vld [vmem:[#allocation4 + $0xe0] sm:$0xff]
    %v132 = vld [vmem:[#allocation4 + $0xe8] sm:$0xff]
    %v133 = vld [vmem:[#allocation4 + $0xf0] sm:$0xff]
    %v134 = vld [vmem:[#allocation4 + $0xf8] sm:$0xff]
    %v135 = vld [vmem:[#allocation4 + $0x100] sm:$0xff]
    %v136 = vld [vmem:[#allocation4 + $0x108] sm:$0xff]
    %v137 = vld [vmem:[#allocation4 + $0x110] sm:$0xff]
    %v138 = vld [vmem:[#allocation4 + $0x118] sm:$0xff]
    %v139 = vld [vmem:[#allocation4 + $0x120] sm:$0xff]
    %v140 = vld [vmem:[#allocation4 + $0x128] sm:$0xff]
    %v141 = vld [vmem:[#allocation4 + $0x130] sm:$0xff]
    %v142 = vld [vmem:[#allocation4 + $0x138] sm:$0xff]
    %v143 = vld [vmem:[#allocation4 + $0x140] sm:$0xff]
    %v144 = vld [vmem:[#allocation4 + $0x148] sm:$0xff]
    %v145 = vld [vmem:[#allocation4 + $0x150] sm:$0xff]
    %v146 = vld [vmem:[#allocation4 + $0x158] sm:$0xff]
    %v147 = vld [vmem:[#allocation4 + $0x160] sm:$0xff]
    %v148 = vld [vmem:[#allocation4 + $0x168] sm:$0xff]
    %v149 = vld [vmem:[#allocation4 + $0x170] sm:$0xff]
    %v150 = vld [vmem:[#allocation4 + $0x178] sm:$0xff]
    %v151 = vsub.f32 %v55, %v103
    %v152 = vsub.f32 %v56, %v104
    %v153 = vsub.f32 %v57, %v105
    %v154 = vsub.f32 %v58, %v106
    %v155 = vsub.f32 %v59, %v107
    %v156 = vsub.f32 %v60, %v108
    %v157 = vsub.f32 %v61, %v109
    %v158 = vsub.f32 %v62, %v110
    %v159 = vsub.f32 %v63, %v111
    %v160 = vsub.f32 %v64, %v112
    %v161 = vsub.f32 %v65, %v113
    %v162 = vsub.f32 %v66, %v114
    %v163 = vsub.f32 %v67, %v115
    %v164 = vsub.f32 %v68, %v116
    %v165 = vsub.f32 %v69, %v117
    %v166 = vsub.f32 %v70, %v118
    %v167 = vsub.f32 %v71, %v119
    %v168 = vsub.f32 %v72, %v120
    %v169 = vsub.f32 %v73, %v121
    %v170 = vsub.f32 %v74, %v122
    %v171 = vsub.f32 %v75, %v123
    %v172 = vsub.f32 %v76, %v124
    %v173 = vsub.f32 %v77, %v125
    %v174 = vsub.f32 %v78, %v126
    %v175 = vsub.f32 %v79, %v127
    %v176 = vsub.f32 %v80, %v128
    %v177 = vsub.f32 %v81, %v129
    %v178 = vsub.f32 %v82, %v130
    %v179 = vsub.f32 %v83, %v131
    %v180 = vsub.f32 %v84, %v132
    %v181 = vsub.f32 %v85, %v133
    %v182 = vsub.f32 %v86, %v134
    %v183 = vsub.f32 %v87, %v135
    %v184 = vsub.f32 %v88, %v136
    %v185 = vsub.f32 %v89, %v137
    %v186 = vsub.f32 %v90, %v138
    %v187 = vsub.f32 %v91, %v139
    %v188 = vsub.f32 %v92, %v140
    %v189 = vsub.f32 %v93, %v141
    %v190 = vsub.f32 %v94, %v142
    %v191 = vsub.f32 %v95, %v143
    %v192 = vsub.f32 %v96, %v144
    %v193 = vsub.f32 %v97, %v145
    %v194 = vsub.f32 %v98, %v146
    %v195 = vsub.f32 %v99, %v147
    %v196 = vsub.f32 %v100, %v148
    %v197 = vsub.f32 %v101, %v149
    %v198 = vsub.f32 %v102, %v150
    %v199 = vadd.f32 %v151, 1e-06
    %v200 = vadd.f32 %v152, 1e-06
    %v201 = vadd.f32 %v153, 1e-06
    %v202 = vadd.f32 %v154, 1e-06
    %v203 = vadd.f32 %v155, 1e-06
    %v204 = vadd.f32 %v156, 1e-06
    %v205 = vadd.f32 %v157, 1e-06
    %v206 = vadd.f32 %v158, 1e-06
    %v207 = vadd.f32 %v159, 1e-06
    %v208 = vadd.f32 %v160, 1e-06
    %v209 = vadd.f32 %v161, 1e-06
    %v210 = vadd.f32 %v162, 1e-06
    %v211 = vadd.f32 %v163, 1e-06
    %v212 = vadd.f32 %v164, 1e-06
    %v213 = vadd.f32 %v165, 1e-06
    %v214 = vadd.f32 %v166, 1e-06
    %v215 = vadd.f32 %v167, 1e-06
    %v216 = vadd.f32 %v168, 1e-06
    %v217 = vadd.f32 %v169, 1e-06
    %v218 = vadd.f32 %v170, 1e-06
    %v219 = vadd.f32 %v171, 1e-06
    %v220 = vadd.f32 %v172, 1e-06
    %v221 = vadd.f32 %v173, 1e-06
    %v222 = vadd.f32 %v174, 1e-06
    %v223 = vadd.f32 %v175, 1e-06
    %v224 = vadd.f32 %v176, 1e-06
    %v225 = vadd.f32 %v177, 1e-06
    %v226 = vadd.f32 %v178, 1e-06
    %v227 = vadd.f32 %v179, 1e-06
    %v228 = vadd.f32 %v180, 1e-06
    %v229 = vadd.f32 %v181, 1e-06
    %v230 = vadd.f32 %v182, 1e-06
    %v231 = vadd.f32 %v183, 1e-06
    %v232 = vadd.f32 %v184, 1e-06
    %v233 = vadd.f32 %v185, 1e-06
    %v234 = vadd.f32 %v186, 1e-06
    %v235 = vadd.f32 %v187, 1e-06
    %v236 = vadd.f32 %v188, 1e-06
    %v237 = vadd.f32 %v189, 1e-06
    %v238 = vadd.f32 %v190, 1e-06
    %v239 = vadd.f32 %v191, 1e-06
    %v240 = vadd.f32 %v192, 1e-06
    %v241 = vadd.f32 %v193, 1e-06
    %v242 = vadd.f32 %v194, 1e-06
    %v243 = vadd.f32 %v195, 1e-06
    %v244 = vadd.f32 %v196, 1e-06
    %v245 = vadd.f32 %v197, 1e-06
    %v246 = vadd.f32 %v198, 1e-06
    %v247 = vmul.f32 %v199, %v199
    %v248 = vmul.f32 %v200, %v200
    %v249 = vmul.f32 %v201, %v201
    %v250 = vmul.f32 %v202, %v202
    %v251 = vmul.f32 %v203, %v203
    %v252 = vmul.f32 %v204, %v204
    %v253 = vmul.f32 %v205, %v205
    %v254 = vmul.f32 %v206, %v206
    %v255 = vmul.f32 %v207, %v207
    %v256 = vmul.f32 %v208, %v208
    %v257 = vmul.f32 %v209, %v209
    %v258 = vmul.f32 %v210, %v210
    %v259 = vmul.f32 %v211, %v211
    %v260 = vmul.f32 %v212, %v212
    %v261 = vmul.f32 %v213, %v213
    %v262 = vmul.f32 %v214, %v214
    %v263 = vmul.f32 %v215, %v215
    %v264 = vmul.f32 %v216, %v216
    %v265 = vmul.f32 %v217, %v217
    %v266 = vmul.f32 %v218, %v218
    %v267 = vmul.f32 %v219, %v219
    %v268 = vmul.f32 %v220, %v220
    %v269 = vmul.f32 %v221, %v221
    %v270 = vmul.f32 %v222, %v222
    %v271 = vmul.f32 %v223, %v223
    %v272 = vmul.f32 %v224, %v224
    %v273 = vmul.f32 %v225, %v225
    %v274 = vmul.f32 %v226, %v226
    %v275 = vmul.f32 %v227, %v227
    %v276 = vmul.f32 %v228, %v228
    %v277 = vmul.f32 %v229, %v229
    %v278 = vmul.f32 %v230, %v230
    %v279 = vmul.f32 %v231, %v231
    %v280 = vmul.f32 %v232, %v232
    %v281 = vmul.f32 %v233, %v233
    %v282 = vmul.f32 %v234, %v234
    %v283 = vmul.f32 %v235, %v235
    %v284 = vmul.f32 %v236, %v236
    %v285 = vmul.f32 %v237, %v237
    %v286 = vmul.f32 %v238, %v238
    %v287 = vmul.f32 %v239, %v239
    %v288 = vmul.f32 %v240, %v240
    %v289 = vmul.f32 %v241, %v241
    %v290 = vmul.f32 %v242, %v242
    %v291 = vmul.f32 %v243, %v243
    %v292 = vmul.f32 %v244, %v244
    %v293 = vmul.f32 %v245, %v245
    %v294 = vmul.f32 %v246, %v246
    %v295 = vadd.f32 %v247, %v248
    %v296 = vadd.f32 %v295, %v249
    %v297 = vadd.f32 %v296, %v250
    %v298 = vadd.f32 %v297, %v251
    %v299 = vadd.f32 %v298, %v252
    %300 = vadd.xlane.f32.xlu0 %v299
    %v301 = vpop.xlane.xlu0 %300
    %v302 = vadd.f32 %v253, %v254
    %v303 = vadd.f32 %v302, %v255
    %v304 = vadd.f32 %v303, %v256
    %v305 = vadd.f32 %v304, %v257
    %v306 = vadd.f32 %v305, %v258
    %307 = vadd.xlane.f32.xlu0 %v306
    %v308 = vpop.xlane.xlu0 %307
    %v309 = vadd.f32 %v259, %v260
    %v310 = vadd.f32 %v309, %v261
    %v311 = vadd.f32 %v310, %v262
    %v312 = vadd.f32 %v311, %v263
    %v313 = vadd.f32 %v312, %v264
    %314 = vadd.xlane.f32.xlu0 %v313
    %v315 = vpop.xlane.xlu0 %314
    %v316 = vadd.f32 %v265, %v266
    %v317 = vadd.f32 %v316, %v267
    %v318 = vadd.f32 %v317, %v268
    %v319 = vadd.f32 %v318, %v269
    %v320 = vadd.f32 %v319, %v270
    %321 = vadd.xlane.f32.xlu0 %v320
    %v322 = vpop.xlane.xlu0 %321
    %v323 = vadd.f32 %v271, %v272
    %v324 = vadd.f32 %v323, %v273
    %v325 = vadd.f32 %v324, %v274
    %v326 = vadd.f32 %v325, %v275
    %v327 = vadd.f32 %v326, %v276
    %328 = vadd.xlane.f32.xlu0 %v327
    %v329 = vpop.xlane.xlu0 %328
    %v330 = vadd.f32 %v277, %v278
    %v331 = vadd.f32 %v330, %v279
    %v332 = vadd.f32 %v331, %v280
    %v333 = vadd.f32 %v332, %v281
    %v334 = vadd.f32 %v333, %v282
    %335 = vadd.xlane.f32.xlu0 %v334
    %v336 = vpop.xlane.xlu0 %335
    %v337 = vadd.f32 %v283, %v284
    %v338 = vadd.f32 %v337, %v285
    %v339 = vadd.f32 %v338, %v286
    %v340 = vadd.f32 %v339, %v287
    %v341 = vadd.f32 %v340, %v288
    %342 = vadd.xlane.f32.xlu0 %v341
    %v343 = vpop.xlane.xlu0 %342
    %v344 = vadd.f32 %v289, %v290
    %v345 = vadd.f32 %v344, %v291
    %v346 = vadd.f32 %v345, %v292
    %v347 = vadd.f32 %v346, %v293
    %v348 = vadd.f32 %v347, %v294
    %349 = vadd.xlane.f32.xlu0 %v348
    %v350 = vpop.xlane.xlu0 %349
    %v351 = vrsqrt.pop %v301
    %v352 = vmul.f32 %v301, %v351
    %vm353 = vcmp.eq.f32.partialorder %v301, inf
    %v354 = vsel %vm353, %v301, %v352
    %vm355 = vcmp.eq.f32.partialorder %v301, 0.0
    %v356 = vand.u32 %v301, 2147483648
    %v357 = vsel %vm355, %v356, %v354
    %v358 = vrsqrt.pop %v308
    %v359 = vmul.f32 %v308, %v358
    %vm360 = vcmp.eq.f32.partialorder %v308, inf
    %v361 = vsel %vm360, %v308, %v359
    %vm362 = vcmp.eq.f32.partialorder %v308, 0.0
    %v363 = vand.u32 %v308, 2147483648
    %v364 = vsel %vm362, %v363, %v361
    %v365 = vrsqrt.pop %v315
    %v366 = vmul.f32 %v315, %v365
    %vm367 = vcmp.eq.f32.partialorder %v315, inf
    %v368 = vsel %vm367, %v315, %v366
    %vm369 = vcmp.eq.f32.partialorder %v315, 0.0
    %v370 = vand.u32 %v315, 2147483648
    %v371 = vsel %vm369, %v370, %v368
    %v372 = vrsqrt.pop %v322
    %v373 = vmul.f32 %v322, %v372
    %vm374 = vcmp.eq.f32.partialorder %v322, inf
    %v375 = vsel %vm374, %v322, %v373
    %vm376 = vcmp.eq.f32.partialorder %v322, 0.0
    %v377 = vand.u32 %v322, 2147483648
    %v378 = vsel %vm376, %v377, %v375
    %v379 = vrsqrt.pop %v329
    %v380 = vmul.f32 %v329, %v379
    %vm381 = vcmp.eq.f32.partialorder %v329, inf
    %v382 = vsel %vm381, %v329, %v380
    %vm383 = vcmp.eq.f32.partialorder %v329, 0.0
    %v384 = vand.u32 %v329, 2147483648
    %v385 = vsel %vm383, %v384, %v382
    %v386 = vrsqrt.pop %v336
    %v387 = vmul.f32 %v336, %v386
    %vm388 = vcmp.eq.f32.partialorder %v336, inf
    %v389 = vsel %vm388, %v336, %v387
    %vm390 = vcmp.eq.f32.partialorder %v336, 0.0
    %v391 = vand.u32 %v336, 2147483648
    %v392 = vsel %vm390, %v391, %v389
    %v393 = vrsqrt.pop %v343
    %v394 = vmul.f32 %v343, %v393
    %vm395 = vcmp.eq.f32.partialorder %v343, inf
    %v396 = vsel %vm395, %v343, %v394
    %vm397 = vcmp.eq.f32.partialorder %v343, 0.0
    %v398 = vand.u32 %v343, 2147483648
    %v399 = vsel %vm397, %v398, %v396
    %v400 = vrsqrt.pop %v350
    %v401 = vmul.f32 %v350, %v400
    %vm402 = vcmp.eq.f32.partialorder %v350, inf
    %v403 = vsel %vm402, %v350, %v401
    %vm404 = vcmp.eq.f32.partialorder %v350, 0.0
    %v405 = vand.u32 %v350, 2147483648
    %v406 = vsel %vm404, %v405, %v403
    %v407 = vld [vmem:[#allocation6] sm:$0xff]
    %v408 = vld [vmem:[#allocation6 + $0x8] sm:$0xff]
    %v409 = vld [vmem:[#allocation6 + $0x10] sm:$0xff]
    %v410 = vld [vmem:[#allocation6 + $0x18] sm:$0xff]
    %v411 = vld [vmem:[#allocation6 + $0x20] sm:$0xff]
    %v412 = vld [vmem:[#allocation6 + $0x28] sm:$0xff]
    %v413 = vld [vmem:[#allocation6 + $0x30] sm:$0xff]
    %v414 = vld [vmem:[#allocation6 + $0x38] sm:$0xff]
    %v415 = vld [vmem:[#allocation6 + $0x40] sm:$0xff]
    %v416 = vld [vmem:[#allocation6 + $0x48] sm:$0xff]
    %v417 = vld [vmem:[#allocation6 + $0x50] sm:$0xff]
    %v418 = vld [vmem:[#allocation6 + $0x58] sm:$0xff]
    %v419 = vld [vmem:[#allocation6 + $0x60] sm:$0xff]
    %v420 = vld [vmem:[#allocation6 + $0x68] sm:$0xff]
    %v421 = vld [vmem:[#allocation6 + $0x70] sm:$0xff]
    %v422 = vld [vmem:[#allocation6 + $0x78] sm:$0xff]
    %v423 = vld [vmem:[#allocation6 + $0x80] sm:$0xff]
    %v424 = vld [vmem:[#allocation6 + $0x88] sm:$0xff]
    %v425 = vld [vmem:[#allocation6 + $0x90] sm:$0xff]
    %v426 = vld [vmem:[#allocation6 + $0x98] sm:$0xff]
    %v427 = vld [vmem:[#allocation6 + $0xa0] sm:$0xff]
    %v428 = vld [vmem:[#allocation6 + $0xa8] sm:$0xff]
    %v429 = vld [vmem:[#allocation6 + $0xb0] sm:$0xff]
    %v430 = vld [vmem:[#allocation6 + $0xb8] sm:$0xff]
    %v431 = vld [vmem:[#allocation6 + $0xc0] sm:$0xff]
    %v432 = vld [vmem:[#allocation6 + $0xc8] sm:$0xff]
    %v433 = vld [vmem:[#allocation6 + $0xd0] sm:$0xff]
    %v434 = vld [vmem:[#allocation6 + $0xd8] sm:$0xff]
    %v435 = vld [vmem:[#allocation6 + $0xe0] sm:$0xff]
    %v436 = vld [vmem:[#allocation6 + $0xe8] sm:$0xff]
    %v437 = vld [vmem:[#allocation6 + $0xf0] sm:$0xff]
    %v438 = vld [vmem:[#allocation6 + $0xf8] sm:$0xff]
    %v439 = vld [vmem:[#allocation6 + $0x100] sm:$0xff]
    %v440 = vld [vmem:[#allocation6 + $0x108] sm:$0xff]
    %v441 = vld [vmem:[#allocation6 + $0x110] sm:$0xff]
    %v442 = vld [vmem:[#allocation6 + $0x118] sm:$0xff]
    %v443 = vld [vmem:[#allocation6 + $0x120] sm:$0xff]
    %v444 = vld [vmem:[#allocation6 + $0x128] sm:$0xff]
    %v445 = vld [vmem:[#allocation6 + $0x130] sm:$0xff]
    %v446 = vld [vmem:[#allocation6 + $0x138] sm:$0xff]
    %v447 = vld [vmem:[#allocation6 + $0x140] sm:$0xff]
    %v448 = vld [vmem:[#allocation6 + $0x148] sm:$0xff]
    %v449 = vld [vmem:[#allocation6 + $0x150] sm:$0xff]
    %v450 = vld [vmem:[#allocation6 + $0x158] sm:$0xff]
    %v451 = vld [vmem:[#allocation6 + $0x160] sm:$0xff]
    %v452 = vld [vmem:[#allocation6 + $0x168] sm:$0xff]
    %v453 = vld [vmem:[#allocation6 + $0x170] sm:$0xff]
    %v454 = vld [vmem:[#allocation6 + $0x178] sm:$0xff]
    %v455 = vsub.f32 %v55, %v407
    %v456 = vsub.f32 %v56, %v408
    %v457 = vsub.f32 %v57, %v409
    %v458 = vsub.f32 %v58, %v410
    %v459 = vsub.f32 %v59, %v411
    %v460 = vsub.f32 %v60, %v412
    %v461 = vsub.f32 %v61, %v413
    %v462 = vsub.f32 %v62, %v414
    %v463 = vsub.f32 %v63, %v415
    %v464 = vsub.f32 %v64, %v416
    %v465 = vsub.f32 %v65, %v417
    %v466 = vsub.f32 %v66, %v418
    %v467 = vsub.f32 %v67, %v419
    %v468 = vsub.f32 %v68, %v420
    %v469 = vsub.f32 %v69, %v421
    %v470 = vsub.f32 %v70, %v422
    %v471 = vsub.f32 %v71, %v423
    %v472 = vsub.f32 %v72, %v424
    %v473 = vsub.f32 %v73, %v425
    %v474 = vsub.f32 %v74, %v426
    %v475 = vsub.f32 %v75, %v427
    %v476 = vsub.f32 %v76, %v428
    %v477 = vsub.f32 %v77, %v429
    %v478 = vsub.f32 %v78, %v430
    %v479 = vsub.f32 %v79, %v431
    %v480 = vsub.f32 %v80, %v432
    %v481 = vsub.f32 %v81, %v433
    %v482 = vsub.f32 %v82, %v434
    %v483 = vsub.f32 %v83, %v435
    %v484 = vsub.f32 %v84, %v436
    %v485 = vsub.f32 %v85, %v437
    %v486 = vsub.f32 %v86, %v438
    %v487 = vsub.f32 %v87, %v439
    %v488 = vsub.f32 %v88, %v440
    %v489 = vsub.f32 %v89, %v441
    %v490 = vsub.f32 %v90, %v442
    %v491 = vsub.f32 %v91, %v443
    %v492 = vsub.f32 %v92, %v444
    %v493 = vsub.f32 %v93, %v445
    %v494 = vsub.f32 %v94, %v446
    %v495 = vsub.f32 %v95, %v447
    %v496 = vsub.f32 %v96, %v448
    %v497 = vsub.f32 %v97, %v449
    %v498 = vsub.f32 %v98, %v450
    %v499 = vsub.f32 %v99, %v451
    %v500 = vsub.f32 %v100, %v452
    %v501 = vsub.f32 %v101, %v453
    %v502 = vsub.f32 %v102, %v454
    %v503 = vadd.f32 %v455, 1e-06
    %v504 = vadd.f32 %v456, 1e-06
    %v505 = vadd.f32 %v457, 1e-06
    %v506 = vadd.f32 %v458, 1e-06
    %v507 = vadd.f32 %v459, 1e-06
    %v508 = vadd.f32 %v460, 1e-06
    %v509 = vadd.f32 %v461, 1e-06
    %v510 = vadd.f32 %v462, 1e-06
    %v511 = vadd.f32 %v463, 1e-06
    %v512 = vadd.f32 %v464, 1e-06
    %v513 = vadd.f32 %v465, 1e-06
    %v514 = vadd.f32 %v466, 1e-06
    %v515 = vadd.f32 %v467, 1e-06
    %v516 = vadd.f32 %v468, 1e-06
    %v517 = vadd.f32 %v469, 1e-06
    %v518 = vadd.f32 %v470, 1e-06
    %v519 = vadd.f32 %v471, 1e-06
    %v520 = vadd.f32 %v472, 1e-06
    %v521 = vadd.f32 %v473, 1e-06
    %v522 = vadd.f32 %v474, 1e-06
    %v523 = vadd.f32 %v475, 1e-06
    %v524 = vadd.f32 %v476, 1e-06
    %v525 = vadd.f32 %v477, 1e-06
    %v526 = vadd.f32 %v478, 1e-06
    %v527 = vadd.f32 %v479, 1e-06
    %v528 = vadd.f32 %v480, 1e-06
    %v529 = vadd.f32 %v481, 1e-06
    %v530 = vadd.f32 %v482, 1e-06
    %v531 = vadd.f32 %v483, 1e-06
    %v532 = vadd.f32 %v484, 1e-06
    %v533 = vadd.f32 %v485, 1e-06
    %v534 = vadd.f32 %v486, 1e-06
    %v535 = vadd.f32 %v487, 1e-06
    %v536 = vadd.f32 %v488, 1e-06
    %v537 = vadd.f32 %v489, 1e-06
    %v538 = vadd.f32 %v490, 1e-06
    %v539 = vadd.f32 %v491, 1e-06
    %v540 = vadd.f32 %v492, 1e-06
    %v541 = vadd.f32 %v493, 1e-06
    %v542 = vadd.f32 %v494, 1e-06
    %v543 = vadd.f32 %v495, 1e-06
    %v544 = vadd.f32 %v496, 1e-06
    %v545 = vadd.f32 %v497, 1e-06
    %v546 = vadd.f32 %v498, 1e-06
    %v547 = vadd.f32 %v499, 1e-06
    %v548 = vadd.f32 %v500, 1e-06
    %v549 = vadd.f32 %v501, 1e-06
    %v550 = vadd.f32 %v502, 1e-06
    %v551 = vmul.f32 %v503, %v503
    %v552 = vmul.f32 %v504, %v504
    %v553 = vmul.f32 %v505, %v505
    %v554 = vmul.f32 %v506, %v506
    %v555 = vmul.f32 %v507, %v507
    %v556 = vmul.f32 %v508, %v508
    %v557 = vmul.f32 %v509, %v509
    %v558 = vmul.f32 %v510, %v510
    %v559 = vmul.f32 %v511, %v511
    %v560 = vmul.f32 %v512, %v512
    %v561 = vmul.f32 %v513, %v513
    %v562 = vmul.f32 %v514, %v514
    %v563 = vmul.f32 %v515, %v515
    %v564 = vmul.f32 %v516, %v516
    %v565 = vmul.f32 %v517, %v517
    %v566 = vmul.f32 %v518, %v518
    %v567 = vmul.f32 %v519, %v519
    %v568 = vmul.f32 %v520, %v520
    %v569 = vmul.f32 %v521, %v521
    %v570 = vmul.f32 %v522, %v522
    %v571 = vmul.f32 %v523, %v523
    %v572 = vmul.f32 %v524, %v524
    %v573 = vmul.f32 %v525, %v525
    %v574 = vmul.f32 %v526, %v526
    %v575 = vmul.f32 %v527, %v527
    %v576 = vmul.f32 %v528, %v528
    %v577 = vmul.f32 %v529, %v529
    %v578 = vmul.f32 %v530, %v530
    %v579 = vmul.f32 %v531, %v531
    %v580 = vmul.f32 %v532, %v532
    %v581 = vmul.f32 %v533, %v533
    %v582 = vmul.f32 %v534, %v534
    %v583 = vmul.f32 %v535, %v535
    %v584 = vmul.f32 %v536, %v536
    %v585 = vmul.f32 %v537, %v537
    %v586 = vmul.f32 %v538, %v538
    %v587 = vmul.f32 %v539, %v539
    %v588 = vmul.f32 %v540, %v540
    %v589 = vmul.f32 %v541, %v541
    %v590 = vmul.f32 %v542, %v542
    %v591 = vmul.f32 %v543, %v543
    %v592 = vmul.f32 %v544, %v544
    %v593 = vmul.f32 %v545, %v545
    %v594 = vmul.f32 %v546, %v546
    %v595 = vmul.f32 %v547, %v547
    %v596 = vmul.f32 %v548, %v548
    %v597 = vmul.f32 %v549, %v549
    %v598 = vmul.f32 %v550, %v550
    %v599 = vadd.f32 %v551, %v552
    %v600 = vadd.f32 %v599, %v553
    %v601 = vadd.f32 %v600, %v554
    %v602 = vadd.f32 %v601, %v555
    %v603 = vadd.f32 %v602, %v556
    %604 = vadd.xlane.f32.xlu0 %v603
    %v605 = vpop.xlane.xlu0 %604
    %v606 = vadd.f32 %v557, %v558
    %v607 = vadd.f32 %v606, %v559
    %v608 = vadd.f32 %v607, %v560
    %v609 = vadd.f32 %v608, %v561
    %v610 = vadd.f32 %v609, %v562
    %611 = vadd.xlane.f32.xlu0 %v610
    %v612 = vpop.xlane.xlu0 %611
    %v613 = vadd.f32 %v563, %v564
    %v614 = vadd.f32 %v613, %v565
    %v615 = vadd.f32 %v614, %v566
    %v616 = vadd.f32 %v615, %v567
    %v617 = vadd.f32 %v616, %v568
    %618 = vadd.xlane.f32.xlu0 %v617
    %v619 = vpop.xlane.xlu0 %618
    %v620 = vadd.f32 %v569, %v570
    %v621 = vadd.f32 %v620, %v571
    %v622 = vadd.f32 %v621, %v572
    %v623 = vadd.f32 %v622, %v573
    %v624 = vadd.f32 %v623, %v574
    %625 = vadd.xlane.f32.xlu0 %v624
    %v626 = vpop.xlane.xlu0 %625
    %v627 = vadd.f32 %v575, %v576
    %v628 = vadd.f32 %v627, %v577
    %v629 = vadd.f32 %v628, %v578
    %v630 = vadd.f32 %v629, %v579
    %v631 = vadd.f32 %v630, %v580
    %632 = vadd.xlane.f32.xlu0 %v631
    %v633 = vpop.xlane.xlu0 %632
    %v634 = vadd.f32 %v581, %v582
    %v635 = vadd.f32 %v634, %v583
    %v636 = vadd.f32 %v635, %v584
    %v637 = vadd.f32 %v636, %v585
    %v638 = vadd.f32 %v637, %v586
    %639 = vadd.xlane.f32.xlu0 %v638
    %v640 = vpop.xlane.xlu0 %639
    %v641 = vadd.f32 %v587, %v588
    %v642 = vadd.f32 %v641, %v589
    %v643 = vadd.f32 %v642, %v590
    %v644 = vadd.f32 %v643, %v591
    %v645 = vadd.f32 %v644, %v592
    %646 = vadd.xlane.f32.xlu0 %v645
    %v647 = vpop.xlane.xlu0 %646
    %v648 = vadd.f32 %v593, %v594
    %v649 = vadd.f32 %v648, %v595
    %v650 = vadd.f32 %v649, %v596
    %v651 = vadd.f32 %v650, %v597
    %v652 = vadd.f32 %v651, %v598
    %653 = vadd.xlane.f32.xlu0 %v652
    %v654 = vpop.xlane.xlu0 %653
    %v655 = vrsqrt.pop %v605
    %v656 = vmul.f32 %v605, %v655
    %vm657 = vcmp.eq.f32.partialorder %v605, inf
    %v658 = vsel %vm657, %v605, %v656
    %vm659 = vcmp.eq.f32.partialorder %v605, 0.0
    %v660 = vand.u32 %v605, 2147483648
    %v661 = vsel %vm659, %v660, %v658
    %v662 = vrsqrt.pop %v612
    %v663 = vmul.f32 %v612, %v662
    %vm664 = vcmp.eq.f32.partialorder %v612, inf
    %v665 = vsel %vm664, %v612, %v663
    %vm666 = vcmp.eq.f32.partialorder %v612, 0.0
    %v667 = vand.u32 %v612, 2147483648
    %v668 = vsel %vm666, %v667, %v665
    %v669 = vrsqrt.pop %v619
    %v670 = vmul.f32 %v619, %v669
    %vm671 = vcmp.eq.f32.partialorder %v619, inf
    %v672 = vsel %vm671, %v619, %v670
    %vm673 = vcmp.eq.f32.partialorder %v619, 0.0
    %v674 = vand.u32 %v619, 2147483648
    %v675 = vsel %vm673, %v674, %v672
    %v676 = vrsqrt.pop %v626
    %v677 = vmul.f32 %v626, %v676
    %vm678 = vcmp.eq.f32.partialorder %v626, inf
    %v679 = vsel %vm678, %v626, %v677
    %vm680 = vcmp.eq.f32.partialorder %v626, 0.0
    %v681 = vand.u32 %v626, 2147483648
    %v682 = vsel %vm680, %v681, %v679
    %v683 = vrsqrt.pop %v633
    %v684 = vmul.f32 %v633, %v683
    %vm685 = vcmp.eq.f32.partialorder %v633, inf
    %v686 = vsel %vm685, %v633, %v684
    %vm687 = vcmp.eq.f32.partialorder %v633, 0.0
    %v688 = vand.u32 %v633, 2147483648
    %v689 = vsel %vm687, %v688, %v686
    %v690 = vrsqrt.pop %v640
    %v691 = vmul.f32 %v640, %v690
    %vm692 = vcmp.eq.f32.partialorder %v640, inf
    %v693 = vsel %vm692, %v640, %v691
    %vm694 = vcmp.eq.f32.partialorder %v640, 0.0
    %v695 = vand.u32 %v640, 2147483648
    %v696 = vsel %vm694, %v695, %v693
    %v697 = vrsqrt.pop %v647
    %v698 = vmul.f32 %v647, %v697
    %vm699 = vcmp.eq.f32.partialorder %v647, inf
    %v700 = vsel %vm699, %v647, %v698
    %vm701 = vcmp.eq.f32.partialorder %v647, 0.0
    %v702 = vand.u32 %v647, 2147483648
    %v703 = vsel %vm701, %v702, %v700
    %v704 = vrsqrt.pop %v654
    %v705 = vmul.f32 %v654, %v704
    %vm706 = vcmp.eq.f32.partialorder %v654, inf
    %v707 = vsel %vm706, %v654, %v705
    %vm708 = vcmp.eq.f32.partialorder %v654, 0.0
    %v709 = vand.u32 %v654, 2147483648
    %v710 = vsel %vm708, %v709, %v707
    %v711 = vsub.f32 %v357, %v661
    %v712 = vsub.f32 %v364, %v668
    %v713 = vsub.f32 %v371, %v675
    %v714 = vsub.f32 %v378, %v682
    %v715 = vsub.f32 %v385, %v689
    %v716 = vsub.f32 %v392, %v696
    %v717 = vsub.f32 %v399, %v703
    %v718 = vsub.f32 %v406, %v710
    %v719 = vadd.f32 %v711, 1.0
    %v720 = vadd.f32 %v712, 1.0
    %v721 = vadd.f32 %v713, 1.0
    %v722 = vadd.f32 %v714, 1.0
    %v723 = vadd.f32 %v715, 1.0
    %v724 = vadd.f32 %v716, 1.0
    %v725 = vadd.f32 %v717, 1.0
    %v726 = vadd.f32 %v718, 1.0
    %v727 = vmax.f32 %v719, 0.0
    %v728 = vmax.f32 %v720, 0.0
    %v729 = vmax.f32 %v721, 0.0
    %v730 = vmax.f32 %v722, 0.0
    %v731 = vmax.f32 %v723, 0.0
    %v732 = vmax.f32 %v724, 0.0
    %v733 = vmax.f32 %v725, 0.0
    %v734 = vmax.f32 %v726, 0.0
    %vm735 = vcmask 7168
    %736 = vst.msk [vmem:[%s3] sm:$0xff] %vm735, %v727
    %737 = vst.msk [vmem:[%s3 + $0x8] sm:$0xff] %vm735, %v728
    %738 = vst.msk [vmem:[%s3 + $0x10] sm:$0xff] %vm735, %v729
    %739 = vst.msk [vmem:[%s3 + $0x18] sm:$0xff] %vm735, %v730
    %740 = vst.msk [vmem:[%s3 + $0x20] sm:$0xff] %vm735, %v731
    %741 = vst.msk [vmem:[%s3 + $0x28] sm:$0xff] %vm735, %v732
    %742 = vst.msk [vmem:[%s3 + $0x30] sm:$0xff] %vm735, %v733
    %743 = vst.msk [vmem:[%s3 + $0x38] sm:$0xff] %vm735, %v734
    // Predicated region
    $region26: #{tpu_custom_call.1} parent=1 // pred_check
      _
    $region27: #{tpu_custom_call.1} parent=1 // pred_check_branch
      %745 = sbr.rel (0) target = $region29
    $region28: #{tpu_custom_call.1} parent=1 // pred_region
      _
    $region29: #{tpu_custom_call.1} parent=1 // pred_fallthru
      _
    // Predicated region
    $region30: #{tpu_custom_call.1} parent=1 // pred_check
      _
    $region31: #{tpu_custom_call.1} parent=1 // pred_check_branch
      %747 = sbr.rel (0) target = $region33
    $region32: #{tpu_custom_call.1} parent=1 // pred_region
      _
    $region33: #{tpu_custom_call.1} parent=1 // pred_fallthru
      _
    %748 = vsyncpa [#allocation3], 1
    %749 = vsyncpa [#allocation5], 1

</llo_original>
